<compile_context>
chip_gen: v6e
topology: v6e:2x2x1
jax: 0.10.0
libtpu: 0.0.40
codegen_flags: <defaults>
</compile_context>

<pallas_src>
import functools

import jax
import jax.numpy as jnp
from jax.experimental import pallas as pl
from jax.experimental.pallas import tpu as pltpu


def mlp_kernel(x_ref, w1_ref, b1_ref, w3_ref, b3_ref, w2_ref, b2_ref, o_ref,
               *, act_dtype):
    x = x_ref[...]                                                   # (1, TB) batch on lanes

    # Layer 1: Linear(1, 32) == outer product -> pure VPU broadcast multiply.
    # (A K=1 MXU matmul would push an almost-empty tile through the systolic array.)
    h = jnp.tanh((w1_ref[...] * x + b1_ref[...]).astype(act_dtype))  # (32, TB)

    # Layer 3: Linear(32, 32) -> the one real MXU matmul, f32 accumulation.
    h = jnp.dot(w3_ref[...].astype(act_dtype), h,
                preferred_element_type=jnp.float32) + b3_ref[...]    # (32, TB)
    h = jnp.tanh(h.astype(act_dtype)).astype(jnp.float32)

    # Layer 2: Linear(32, 1) == weighted sublane reduce -> VPU mul + XLU sum.
    # Result stays lane-dense (1, TB) instead of a masked (TB, 1) partial store.
    y = jnp.sum(w2_ref[...] * h, axis=0, keepdims=True) + b2_ref[...]  # (1, TB)
    o_ref[...] = y.astype(o_ref.dtype)


@functools.partial(jax.jit, static_argnames=("block_n", "use_bf16"))
def neural_net_forward(x, w1, b1, w3, b3, w2, b2, block_n=2048, use_bf16=False):
    """x: (N, 1) f32. Weights in kernel layout (see init_params). Returns (N, 1).

    block_n: batch-tile size on the lane axis. Default 2048 amortizes the
      ~0.35us/step grid overhead; per-tile VMEM is only ~0.5 MiB so it fits
      comfortably on v5e/v6e (128 MiB) and v7x (64 MiB).
    use_bf16: cast tanh inputs / the middle matmul operands to bf16
      (~2x EUP+MXU throughput on v6e/v7x). Keep False on v5e (no bf16 VPU/EUP)
      and for bit-tight comparison against the f32 reference.
    """
    n = x.shape[0]
    # Batch -> lane axis: lane-dense (1, N) input & output, padded to the tile.
    tb = min(block_n, pl.cdiv(n, 128) * 128)          # lane-aligned tile size
    n_pad = pl.cdiv(n, tb) * tb                       # no silently-dropped rows
    xr = jnp.zeros((1, n_pad), x.dtype).at[:, :n].set(x.reshape(1, n))
    grid = (n_pad // tb,)

    # Weights/biases are <5 KiB total: keep them VMEM-resident every step.
    full = lambda a: pl.BlockSpec(a.shape, lambda i: (0, 0))
    kernel = functools.partial(
        mlp_kernel, act_dtype=jnp.bfloat16 if use_bf16 else jnp.float32)

    out = pl.pallas_call(
        kernel,
        out_shape=jax.ShapeDtypeStruct((1, n_pad), x.dtype),
        grid=grid,
        in_specs=[
            pl.BlockSpec((1, tb), lambda i: (0, i)),   # x tile: batch on lanes
            full(w1), full(b1),
            full(w3), full(b3),
            full(w2), full(b2),
        ],
        out_specs=pl.BlockSpec((1, tb), lambda i: (0, i)),
        compiler_params=pltpu.CompilerParams(
            dimension_semantics=("parallel",)),        # shards grid over v7x's 2 TCs
    )(xr, w1, b1, w3, b3, w2, b2)

    return out[0, :n].reshape(n, 1)


def init_params(key):
    # Deterministic init mimicking PyTorch's U(-1/sqrt(fan_in), 1/sqrt(fan_in)),
    # stored directly in the kernel's transposed layout (features on sublanes).
    ks = jax.random.split(key, 6)

    def uinit(k, shape, fan_in):
        bound = 1.0 / jnp.sqrt(fan_in)
        return jax.random.uniform(k, shape, jnp.float32, -bound, bound)

    w1 = uinit(ks[0], (32, 1), 1.0)      # layer1.weight  [out=32, in=1]
    b1 = uinit(ks[1], (32, 1), 1.0)      # layer1.bias    (column)
    w3 = uinit(ks[2], (32, 32), 32.0)    # layer3.weight  [out=32, in=32]
    b3 = uinit(ks[3], (32, 1), 32.0)     # layer3.bias    (column)
    w2 = uinit(ks[4], (32, 1), 32.0)     # layer2.weight^T [in=32, out=1]
    b2 = uinit(ks[5], (1, 1), 32.0)      # layer2.bias
    return w1, b1, w3, b3, w2, b2


def reference_forward(x, w1, b1, w3, b3, w2, b2):
    # Pure-JAX reference in the standard (N, feature) layout.
    h = jnp.tanh(x @ w1.T + b1.T)        # (N, 32)
    h = jnp.tanh(h @ w3.T + b3.T)        # (N, 32)
    return h @ w2 + b2.T                 # (N, 1)


if __name__ == "__main__":
    key = jax.random.PRNGKey(0)
    kx, kp = jax.random.split(key)

    n = 300                              # deliberately NOT a multiple of the tile
    x = jax.random.normal(kx, (n, 1), jnp.float32)
    params = init_params(kp)

    # Small-tile call: exercises a multi-step grid plus the padding path.
    out = neural_net_forward(x, *params, block_n=128)
    out = jax.block_until_ready(out)

    ref = reference_forward(x, *params)
    assert out.shape == (n, 1)
    assert jnp.allclose(out, ref, atol=1e-5, rtol=1e-5)

    # Default large-tile (single-step) call.
    out2 = jax.block_until_ready(neural_net_forward(x, *params))
    assert jnp.allclose(out2, ref, atol=1e-5, rtol=1e-5)

    print("KERNEL_OK")
</pallas_src>

<mosaic_0001>
module attributes {stable_mosaic.version = 11 : i64} {
  func.func @mlp_kernel(%arg0: i32, %arg1: memref<1x128xf32, #tpu.memory_space<vmem>>, %arg2: memref<32x1xf32, #tpu.memory_space<vmem>>, %arg3: memref<32x1xf32, #tpu.memory_space<vmem>>, %arg4: memref<32x32xf32, #tpu.memory_space<vmem>>, %arg5: memref<32x1xf32, #tpu.memory_space<vmem>>, %arg6: memref<32x1xf32, #tpu.memory_space<vmem>>, %arg7: memref<1x1xf32, #tpu.memory_space<vmem>>, %arg8: memref<1x128xf32, #tpu.memory_space<vmem>>) attributes {dimension_semantics = [#tpu.dimension_semantics<parallel>], iteration_bounds = array<i64: 3>, scalar_prefetch = 0 : i64, scratch_operands = 0 : i64, tpu.core_type = #tpu.core_type<tc>, window_params = [{transform_indices = @transform_0, window_bounds = array<i64: 1, 128>}, {pipeline_mode = #tpu.pipeline_mode<synchronous>, transform_indices = @transform_1, window_bounds = array<i64: 32, 1>}, {pipeline_mode = #tpu.pipeline_mode<synchronous>, transform_indices = @transform_2, window_bounds = array<i64: 32, 1>}, {pipeline_mode = #tpu.pipeline_mode<synchronous>, transform_indices = @transform_3, window_bounds = array<i64: 32, 32>}, {pipeline_mode = #tpu.pipeline_mode<synchronous>, transform_indices = @transform_4, window_bounds = array<i64: 32, 1>}, {pipeline_mode = #tpu.pipeline_mode<synchronous>, transform_indices = @transform_5, window_bounds = array<i64: 32, 1>}, {pipeline_mode = #tpu.pipeline_mode<synchronous>, transform_indices = @transform_6, window_bounds = array<i64: 1, 1>}, {transform_indices = @transform_7, window_bounds = array<i64: 1, 128>}]} {
    %c0 = arith.constant 0 : index
    %c0_0 = arith.constant 0 : index
    %0 = vector.load %arg1[%c0, %c0_0] : memref<1x128xf32, #tpu.memory_space<vmem>>, vector<1x128xf32>
    %c0_1 = arith.constant 0 : index
    %c0_2 = arith.constant 0 : index
    %1 = vector.load %arg2[%c0_1, %c0_2] : memref<32x1xf32, #tpu.memory_space<vmem>>, vector<32x1xf32>
    %2 = vector.broadcast %1 : vector<32x1xf32> to vector<32x128xf32>
    %3 = vector.broadcast %0 : vector<1x128xf32> to vector<32x128xf32>
    %4 = arith.mulf %2, %3 : vector<32x128xf32>
    %c0_3 = arith.constant 0 : index
    %c0_4 = arith.constant 0 : index
    %5 = vector.load %arg3[%c0_3, %c0_4] : memref<32x1xf32, #tpu.memory_space<vmem>>, vector<32x1xf32>
    %6 = vector.broadcast %5 : vector<32x1xf32> to vector<32x128xf32>
    %7 = arith.addf %4, %6 : vector<32x128xf32>
    %8 = math.tanh %7 : vector<32x128xf32>
    %c0_5 = arith.constant 0 : index
    %c0_6 = arith.constant 0 : index
    %9 = vector.load %arg4[%c0_5, %c0_6] : memref<32x32xf32, #tpu.memory_space<vmem>>, vector<32x32xf32>
    %cst = arith.constant dense<0.000000e+00> : vector<32x128xf32>
    %10 = tpu.matmul %9, %8, %cst {dimension_numbers = #tpu.dot_dimension_numbers<[1], [0], [0], [1], [0, 0, 1, 1], [], []>} : vector<32x32xf32>, vector<32x128xf32>, vector<32x128xf32> -> vector<32x128xf32>
    %c0_7 = arith.constant 0 : index
    %c0_8 = arith.constant 0 : index
    %11 = vector.load %arg5[%c0_7, %c0_8] : memref<32x1xf32, #tpu.memory_space<vmem>>, vector<32x1xf32>
    %12 = vector.broadcast %11 : vector<32x1xf32> to vector<32x128xf32>
    %13 = arith.addf %10, %12 : vector<32x128xf32>
    %14 = math.tanh %13 : vector<32x128xf32>
    %c0_9 = arith.constant 0 : index
    %c0_10 = arith.constant 0 : index
    %15 = vector.load %arg6[%c0_9, %c0_10] : memref<32x1xf32, #tpu.memory_space<vmem>>, vector<32x1xf32>
    %16 = vector.broadcast %15 : vector<32x1xf32> to vector<32x128xf32>
    %17 = arith.mulf %16, %14 : vector<32x128xf32>
    %cst_11 = arith.constant dense<0.000000e+00> : vector<128xf32>
    %18 = vector.multi_reduction <add>, %17, %cst_11 [0] : vector<32x128xf32> to vector<128xf32>
    %19 = vector.shape_cast %18 : vector<128xf32> to vector<1x128xf32>
    %c0_12 = arith.constant 0 : index
    %c0_13 = arith.constant 0 : index
    %20 = vector.load %arg7[%c0_12, %c0_13] : memref<1x1xf32, #tpu.memory_space<vmem>>, vector<1x1xf32>
    %21 = vector.broadcast %20 : vector<1x1xf32> to vector<1x128xf32>
    %22 = arith.addf %19, %21 : vector<1x128xf32>
    %c0_14 = arith.constant 0 : index
    %c0_15 = arith.constant 0 : index
    %23 = vector.load %arg8[%c0_14, %c0_15] : memref<1x128xf32, #tpu.memory_space<vmem>>, vector<1x128xf32>
    tpu.vector_store %arg8[%c0_14, %c0_15], %22 {strides = array<i32>} : memref<1x128xf32, #tpu.memory_space<vmem>>, vector<1x128xf32>,
    return
  }
  func.func @transform_0(%arg0: i32) -> (i32, i32) {
    %c0_i32 = arith.constant 0 : i32
    %c0_i32_0 = arith.constant 0 : i32
    return %c0_i32, %arg0 : i32, i32
  }
  func.func @transform_1(%arg0: i32) -> (i32, i32) {
    %c0_i32 = arith.constant 0 : i32
    %c0_i32_0 = arith.constant 0 : i32
    %c0_i32_1 = arith.constant 0 : i32
    return %c0_i32, %c0_i32_0 : i32, i32
  }
  func.func @transform_2(%arg0: i32) -> (i32, i32) {
    %c0_i32 = arith.constant 0 : i32
    %c0_i32_0 = arith.constant 0 : i32
    %c0_i32_1 = arith.constant 0 : i32
    return %c0_i32, %c0_i32_0 : i32, i32
  }
  func.func @transform_3(%arg0: i32) -> (i32, i32) {
    %c0_i32 = arith.constant 0 : i32
    %c0_i32_0 = arith.constant 0 : i32
    %c0_i32_1 = arith.constant 0 : i32
    return %c0_i32, %c0_i32_0 : i32, i32
  }
  func.func @transform_4(%arg0: i32) -> (i32, i32) {
    %c0_i32 = arith.constant 0 : i32
    %c0_i32_0 = arith.constant 0 : i32
    %c0_i32_1 = arith.constant 0 : i32
    return %c0_i32, %c0_i32_0 : i32, i32
  }
  func.func @transform_5(%arg0: i32) -> (i32, i32) {
    %c0_i32 = arith.constant 0 : i32
    %c0_i32_0 = arith.constant 0 : i32
    %c0_i32_1 = arith.constant 0 : i32
    return %c0_i32, %c0_i32_0 : i32, i32
  }
  func.func @transform_6(%arg0: i32) -> (i32, i32) {
    %c0_i32 = arith.constant 0 : i32
    %c0_i32_0 = arith.constant 0 : i32
    %c0_i32_1 = arith.constant 0 : i32
    return %c0_i32, %c0_i32_0 : i32, i32
  }
  func.func @transform_7(%arg0: i32) -> (i32, i32) {
    %c0_i32 = arith.constant 0 : i32
    %c0_i32_0 = arith.constant 0 : i32
    return %c0_i32, %arg0 : i32, i32
  }
}

</mosaic_0001>

<llo_original>
// kernel: neural_net_forward.1
$region0: #{neural_net_forward.1}
  #allocation0 [shape = 'u32[]', space=smem, size = 0x4, offset = 0x4, fixed_abs, tag = 'smem constant byte address 0x4 - core index']
  #allocation1 [shape = 'u32[144,128]{1,0:T(1,128)}', space=vmem, size = 0x12000, scoped, tag = 'internal scratch']
  #allocation2 [shape = 'f32[1,1]{1,0:T(1,128)S(1)}', space=vmem, size = 0x200, scoped, tag = 'scoped memory for neural_net_forward.1']
  %s0 = inlined_call_operand.vmem [shape: f32[1,384], index: 0, kind: input, shape index: {}]
  %s1 = inlined_call_operand.vmem [shape: f32[32,1], index: 1, kind: input, shape index: {}]
  %s2 = inlined_call_operand.vmem [shape: f32[32,1], index: 2, kind: input, shape index: {}]
  %s3 = inlined_call_operand.vmem [shape: f32[32,32], index: 3, kind: input, shape index: {}]
  %s4 = inlined_call_operand.vmem [shape: f32[32,1], index: 4, kind: input, shape index: {}]
  %s5 = inlined_call_operand.vmem [shape: f32[32,1], index: 5, kind: input, shape index: {}]
  %s6 = inlined_call_operand.<no memory space> [shape: f32[1,1], index: 6, kind: input, shape index: {}]
  %s7 = inlined_call_operand.vmem [shape: f32[1,384], index: 7, kind: output, shape index: {}]
  %s8 = sld [smem:[#allocation0]]
  $region61: #{neural_net_forward.1} parent=0
    _
  %s10 = ssub.s32 1, %s8
  %s11 = scalar_select 0, %s10, %s8
  %v12 = vstv %s6
  %13 = vst [vmem:[#allocation2] sm:$0x1] %v12
  loop: start=0, step=1, limit=5
  $region2: #{neural_net_forward.1} parent=0 // loop_pre_header
    _
  $region3: #{neural_net_forward.1} parent=0 // loop_header
    %s15 = sphi 0, %s19
    %p16 = scmp.ge.s32.totalorder %s15, 5
    %s25 = sphi 0, %s27
    %s28 = sphi 0, %s25
    %s29 = sphi 0, %s28
    %s45 = sphi 0, %s29
    %s49 = sphi 0, %s49
    %s51 = sphi 0, %s49
    %s52 = sphi 0, %s51
    %s66 = sphi 0, %s52
    %s70 = sphi 0, %s70
    %s72 = sphi 0, %s70
    %s73 = sphi 0, %s72
    %s87 = sphi 0, %s73
    %s91 = sphi 0, %s91
    %s93 = sphi 0, %s91
    %s94 = sphi 0, %s93
    %s108 = sphi 0, %s94
    %s112 = sphi 0, %s112
    %s114 = sphi 0, %s112
    %s115 = sphi 0, %s114
    %s129 = sphi 0, %s115
    %s133 = sphi 0, %s133
    %s135 = sphi 0, %s133
    %s136 = sphi 0, %s135
    %s150 = sphi 0, %s136
    %s154 = sphi 0, %s154
    %s156 = sphi 0, %s154
    %s157 = sphi 0, %s156
    %s171 = sphi 0, %s157
    %s177 = sphi 0, %s179
    %s180 = sphi 0, %s177
    %s181 = sphi 0, %s180
    %s197 = sphi 0, %s181
  $region4: #{neural_net_forward.1} parent=0 // loop_header_branch
    %18 = sbr.rel (%p16) target = $region8
  $region5: #{neural_net_forward.1} parent=0 // loop_body
    %s20 = ssub.s32 %s15, 1
    %s21 = ssub.s32 %s15, 2
    %s22 = sadd.s32 %s15, 1
    %s23 = ssub.s32 %s15, %s22
    %p24 = scmp.eq.s32.totalorder %s23, 0
    %s26 = sadd.s32 %s25, 1
    %s27 = scalar_select %p24, %s25, %s26
    %p30 = pneg %p24
    %p31 = scmp.eq.s32.totalorder %s15, 2
    %p32 = por %p30, %p31
    %p33 = scmp.ne.s32.totalorder %s25, %s28
    %p34 = scmp.eq.s32.totalorder %s15, 0
    %p35 = por %p33, %p34
    %p36 = scmp.ne.s32.totalorder %s25, %s28
    %p37 = scmp.eq.s32.totalorder %s20, 2
    %p38 = por %p36, %p37
    %p39 = scmp.ne.s32.totalorder %s28, %s29
    %p40 = scmp.eq.s32.totalorder %s20, 0
    %p41 = por %p39, %p40
    %p42 = scmp.ne.s32.totalorder %s28, %s29
    %p43 = scmp.eq.s32.totalorder %s21, 2
    %p44 = por %p42, %p43
    %p46 = scmp.ne.s32.totalorder %s29, %s45
    %p47 = scmp.eq.s32.totalorder %s21, 0
    %p48 = por %p46, %p47
    %s50 = sadd.s32 %s49, 1
    %p53 = scmp.eq.s32.totalorder %s15, 2
    %p54 = scmp.ne.s32.totalorder %s49, %s51
    %p55 = scmp.eq.s32.totalorder %s15, 0
    %p56 = por %p54, %p55
    %p57 = scmp.ne.s32.totalorder %s49, %s51
    %p58 = scmp.eq.s32.totalorder %s20, 2
    %p59 = por %p57, %p58
    %p60 = scmp.ne.s32.totalorder %s51, %s52
    %p61 = scmp.eq.s32.totalorder %s20, 0
    %p62 = por %p60, %p61
    %p63 = scmp.ne.s32.totalorder %s51, %s52
    %p64 = scmp.eq.s32.totalorder %s21, 2
    %p65 = por %p63, %p64
    %p67 = scmp.ne.s32.totalorder %s52, %s66
    %p68 = scmp.eq.s32.totalorder %s21, 0
    %p69 = por %p67, %p68
    %s71 = sadd.s32 %s70, 1
    %p74 = scmp.eq.s32.totalorder %s15, 2
    %p75 = scmp.ne.s32.totalorder %s70, %s72
    %p76 = scmp.eq.s32.totalorder %s15, 0
    %p77 = por %p75, %p76
    %p78 = scmp.ne.s32.totalorder %s70, %s72
    %p79 = scmp.eq.s32.totalorder %s20, 2
    %p80 = por %p78, %p79
    %p81 = scmp.ne.s32.totalorder %s72, %s73
    %p82 = scmp.eq.s32.totalorder %s20, 0
    %p83 = por %p81, %p82
    %p84 = scmp.ne.s32.totalorder %s72, %s73
    %p85 = scmp.eq.s32.totalorder %s21, 2
    %p86 = por %p84, %p85
    %p88 = scmp.ne.s32.totalorder %s73, %s87
    %p89 = scmp.eq.s32.totalorder %s21, 0
    %p90 = por %p88, %p89
    %s92 = sadd.s32 %s91, 1
    %p95 = scmp.eq.s32.totalorder %s15, 2
    %p96 = scmp.ne.s32.totalorder %s91, %s93
    %p97 = scmp.eq.s32.totalorder %s15, 0
    %p98 = por %p96, %p97
    %p99 = scmp.ne.s32.totalorder %s91, %s93
    %p100 = scmp.eq.s32.totalorder %s20, 2
    %p101 = por %p99, %p100
    %p102 = scmp.ne.s32.totalorder %s93, %s94
    %p103 = scmp.eq.s32.totalorder %s20, 0
    %p104 = por %p102, %p103
    %p105 = scmp.ne.s32.totalorder %s93, %s94
    %p106 = scmp.eq.s32.totalorder %s21, 2
    %p107 = por %p105, %p106
    %p109 = scmp.ne.s32.totalorder %s94, %s108
    %p110 = scmp.eq.s32.totalorder %s21, 0
    %p111 = por %p109, %p110
    %s113 = sadd.s32 %s112, 1
    %p116 = scmp.eq.s32.totalorder %s15, 2
    %p117 = scmp.ne.s32.totalorder %s112, %s114
    %p118 = scmp.eq.s32.totalorder %s15, 0
    %p119 = por %p117, %p118
    %p120 = scmp.ne.s32.totalorder %s112, %s114
    %p121 = scmp.eq.s32.totalorder %s20, 2
    %p122 = por %p120, %p121
    %p123 = scmp.ne.s32.totalorder %s114, %s115
    %p124 = scmp.eq.s32.totalorder %s20, 0
    %p125 = por %p123, %p124
    %p126 = scmp.ne.s32.totalorder %s114, %s115
    %p127 = scmp.eq.s32.totalorder %s21, 2
    %p128 = por %p126, %p127
    %p130 = scmp.ne.s32.totalorder %s115, %s129
    %p131 = scmp.eq.s32.totalorder %s21, 0
    %p132 = por %p130, %p131
    %s134 = sadd.s32 %s133, 1
    %p137 = scmp.eq.s32.totalorder %s15, 2
    %p138 = scmp.ne.s32.totalorder %s133, %s135
    %p139 = scmp.eq.s32.totalorder %s15, 0
    %p140 = por %p138, %p139
    %p141 = scmp.ne.s32.totalorder %s133, %s135
    %p142 = scmp.eq.s32.totalorder %s20, 2
    %p143 = por %p141, %p142
    %p144 = scmp.ne.s32.totalorder %s135, %s136
    %p145 = scmp.eq.s32.totalorder %s20, 0
    %p146 = por %p144, %p145
    %p147 = scmp.ne.s32.totalorder %s135, %s136
    %p148 = scmp.eq.s32.totalorder %s21, 2
    %p149 = por %p147, %p148
    %p151 = scmp.ne.s32.totalorder %s136, %s150
    %p152 = scmp.eq.s32.totalorder %s21, 0
    %p153 = por %p151, %p152
    %s155 = sadd.s32 %s154, 1
    %p158 = scmp.eq.s32.totalorder %s15, 2
    %p159 = scmp.ne.s32.totalorder %s154, %s156
    %p160 = scmp.eq.s32.totalorder %s15, 0
    %p161 = por %p159, %p160
    %p162 = scmp.ne.s32.totalorder %s154, %s156
    %p163 = scmp.eq.s32.totalorder %s20, 2
    %p164 = por %p162, %p163
    %p165 = scmp.ne.s32.totalorder %s156, %s157
    %p166 = scmp.eq.s32.totalorder %s20, 0
    %p167 = por %p165, %p166
    %p168 = scmp.ne.s32.totalorder %s156, %s157
    %p169 = scmp.eq.s32.totalorder %s21, 2
    %p170 = por %p168, %p169
    %p172 = scmp.ne.s32.totalorder %s157, %s171
    %p173 = scmp.eq.s32.totalorder %s21, 0
    %p174 = por %p172, %p173
    %s175 = ssub.s32 %s15, %s22
    %p176 = scmp.eq.s32.totalorder %s175, 0
    %s178 = sadd.s32 %s177, 1
    %s179 = scalar_select %p176, %s177, %s178
    %p182 = pneg %p176
    %p183 = scmp.eq.s32.totalorder %s15, 2
    %p184 = por %p182, %p183
    %p185 = scmp.ne.s32.totalorder %s177, %s180
    %p186 = scmp.eq.s32.totalorder %s15, 0
    %p187 = por %p185, %p186
    %p188 = scmp.ne.s32.totalorder %s177, %s180
    %p189 = scmp.eq.s32.totalorder %s20, 2
    %p190 = por %p188, %p189
    %p191 = scmp.ne.s32.totalorder %s180, %s181
    %p192 = scmp.eq.s32.totalorder %s20, 0
    %p193 = por %p191, %p192
    %p194 = scmp.ne.s32.totalorder %s180, %s181
    %p195 = scmp.eq.s32.totalorder %s21, 2
    %p196 = por %p194, %p195
    %p198 = scmp.ne.s32.totalorder %s181, %s197
    %p199 = scmp.eq.s32.totalorder %s21, 0
    %p200 = por %p198, %p199
    %p201 = scmp.le.s32.totalorder 1, %s15
    %p202 = scmp.lt.s32.totalorder %s15, 4
    %p203 = pnand %p201, %p202
    %p204 = pneg %p203
    // Predicated region
    $region9: #{neural_net_forward.1} parent=5 // pred_check
      _
    $region10: #{neural_net_forward.1} parent=5 // pred_check_branch
      %206 = sbr.rel (%p203) target = $region12
    $region11: #{neural_net_forward.1} parent=5 // pred_region
      %s207 = ssub.s32 %s15, 1
      // Predicated region
      $region13: #{neural_net_forward.1} parent=11 // pred_check
        %p208 = pneg %p62
      $region14: #{neural_net_forward.1} parent=11 // pred_check_branch
        %210 = sbr.rel (%p208) target = $region16
      $region15: #{neural_net_forward.1} parent=11 // pred_region
        _
      $region16: #{neural_net_forward.1} parent=11 // pred_fallthru
        _
      // Predicated region
      $region17: #{neural_net_forward.1} parent=11 // pred_check
        %p211 = pneg %p83
      $region18: #{neural_net_forward.1} parent=11 // pred_check_branch
        %213 = sbr.rel (%p211) target = $region20
      $region19: #{neural_net_forward.1} parent=11 // pred_region
        _
      $region20: #{neural_net_forward.1} parent=11 // pred_fallthru
        _
      // Predicated region
      $region21: #{neural_net_forward.1} parent=11 // pred_check
        %p214 = pneg %p104
      $region22: #{neural_net_forward.1} parent=11 // pred_check_branch
        %216 = sbr.rel (%p214) target = $region24
      $region23: #{neural_net_forward.1} parent=11 // pred_region
        _
      $region24: #{neural_net_forward.1} parent=11 // pred_fallthru
        _
      // Predicated region
      $region25: #{neural_net_forward.1} parent=11 // pred_check
        %p217 = pneg %p125
      $region26: #{neural_net_forward.1} parent=11 // pred_check_branch
        %219 = sbr.rel (%p217) target = $region28
      $region27: #{neural_net_forward.1} parent=11 // pred_region
        _
      $region28: #{neural_net_forward.1} parent=11 // pred_fallthru
        _
      // Predicated region
      $region29: #{neural_net_forward.1} parent=11 // pred_check
        %p220 = pneg %p146
      $region30: #{neural_net_forward.1} parent=11 // pred_check_branch
        %222 = sbr.rel (%p220) target = $region32
      $region31: #{neural_net_forward.1} parent=11 // pred_region
        _
      $region32: #{neural_net_forward.1} parent=11 // pred_fallthru
        _
      // Predicated region
      $region33: #{neural_net_forward.1} parent=11 // pred_check
        %p223 = pneg %p167
      $region34: #{neural_net_forward.1} parent=11 // pred_check_branch
        %225 = sbr.rel (%p223) target = $region36
      $region35: #{neural_net_forward.1} parent=11 // pred_region
        _
      $region36: #{neural_net_forward.1} parent=11 // pred_fallthru
        _
    $region12: #{neural_net_forward.1} parent=5 // pred_fallthru
      _
    %p226 = scmp.lt.s32.totalorder %s15, 3
    // Predicated region
    $region37: #{neural_net_forward.1} parent=5 // pred_check
      %p227 = pneg %p226
    $region38: #{neural_net_forward.1} parent=5 // pred_check_branch
      %229 = sbr.rel (%p227) target = $region40
    $region39: #{neural_net_forward.1} parent=5 // pred_region
      // Predicated region
      $region41: #{neural_net_forward.1} parent=39 // pred_check
        %p230 = pneg %p35
      $region42: #{neural_net_forward.1} parent=39 // pred_check_branch
        %232 = sbr.rel (%p230) target = $region44
      $region43: #{neural_net_forward.1} parent=39 // pred_region
        %p233 = scmp.lt.s32.totalorder %s15, 2
        %s234 = scalar_select %p233, %s15, 2
        %s235 = scalar_lea.vmem %s0, %s234
      $region44: #{neural_net_forward.1} parent=39 // pred_fallthru
        _
    $region40: #{neural_net_forward.1} parent=5 // pred_fallthru
      _
    %p236 = scmp.le.s32.totalorder 1, %s15
    %p237 = scmp.lt.s32.totalorder %s15, 4
    %p238 = pnand %p236, %p237
    %p239 = pneg %p238
    // Predicated region
    $region45: #{neural_net_forward.1} parent=5 // pred_check
      _
    $region46: #{neural_net_forward.1} parent=5 // pred_check_branch
      %241 = sbr.rel (%p238) target = $region48
    $region47: #{neural_net_forward.1} parent=5 // pred_region
      %s242 = ssub.s32 %s15, 1
      %p243 = scmp.lt.s32.totalorder %s20, 2
      %s244 = scalar_select %p243, %s20, 2
      %s245 = scalar_lea.vmem %s0, %s244
      %p246 = pneg %p41
      %p247 = pneg %p38
      %p248 = pneg %p62
      %p249 = pneg %p59
      %p250 = pneg %p83
      %p251 = pneg %p80
      %p252 = pneg %p104
      %p253 = pneg %p101
      %p254 = pneg %p125
      %p255 = pneg %p122
      %p256 = pneg %p146
      %p257 = pneg %p143
      %p258 = pneg %p167
      %p259 = pneg %p164
      %p260 = pneg %p193
      %p261 = pneg %p190
      %p262 = scmp.lt.s32.totalorder %s20, 2
      %s263 = scalar_select %p262, %s20, 2
      %s264 = scalar_lea.vmem %s7, %s263
      %p265 = scmp.lt.s32.totalorder %s20, 2
      %s266 = scalar_select %p265, %s20, 2
      %s267 = scalar_lea.vmem %s0, %s266
      %p268 = scmp.lt.s32.totalorder %s20, 2
      %s269 = scalar_select %p268, %s20, 2
      %s270 = scalar_lea.vmem %s7, %s269
      %v271 = vld [vmem:[%s267] sm:$0x1]
      %v272 = vld [vmem:[%s1] sm:$0xff]
      %v273 = vld [vmem:[%s1 + $0x8] sm:$0xff]
      %v274 = vld [vmem:[%s1 + $0x10] sm:$0xff]
      %v275 = vld [vmem:[%s1 + $0x18] sm:$0xff]
      %277 = vset.pattern.permute.xlu0 0
      %278 = vperm.xlu0 %277, %v272
      %v279 = vpop.permute.xlu0 %278
      %282 = vset.pattern.permute.xlu0 0
      %283 = vperm.xlu0 %282, %v273
      %v284 = vpop.permute.xlu0 %283
      %287 = vset.pattern.permute.xlu0 0
      %288 = vperm.xlu0 %287, %v274
      %v289 = vpop.permute.xlu0 %288
      %292 = vset.pattern.permute.xlu0 0
      %293 = vperm.xlu0 %292, %v275
      %v294 = vpop.permute.xlu0 %293
      %v297 = vlaneseq
      %v298 = vshrl.u32 %v297, 7
      %v299 = vsub.s32 0, %v298
      %v300 = vrot.slane %v271, %v299
      %v302 = vmul.f32 %v279, %v300
      %v303 = vmul.f32 %v284, %v300
      %v304 = vmul.f32 %v289, %v300
      %v305 = vmul.f32 %v294, %v300
      %v306 = vld [vmem:[%s2] sm:$0xff]
      %v307 = vld [vmem:[%s2 + $0x8] sm:$0xff]
      %v308 = vld [vmem:[%s2 + $0x10] sm:$0xff]
      %v309 = vld [vmem:[%s2 + $0x18] sm:$0xff]
      %311 = vset.pattern.permute.xlu0 0
      %312 = vperm.xlu0 %311, %v306
      %v313 = vpop.permute.xlu0 %312
      %316 = vset.pattern.permute.xlu0 0
      %317 = vperm.xlu0 %316, %v307
      %v318 = vpop.permute.xlu0 %317
      %321 = vset.pattern.permute.xlu0 0
      %322 = vperm.xlu0 %321, %v308
      %v323 = vpop.permute.xlu0 %322
      %326 = vset.pattern.permute.xlu0 0
      %327 = vperm.xlu0 %326, %v309
      %v328 = vpop.permute.xlu0 %327
      %v330 = vadd.f32 %v302, %v313
      %v331 = vadd.f32 %v303, %v318
      %v332 = vadd.f32 %v304, %v323
      %v333 = vadd.f32 %v305, %v328
      %v334 = vtanh.pop %v330
      %v335 = vtanh.pop %v331
      %v336 = vtanh.pop %v332
      %v337 = vtanh.pop %v333
      %v338 = vld [vmem:[%s3] sm:$0xff]
      %v339 = vld [vmem:[%s3 + $0x8] sm:$0xff]
      %v340 = vld [vmem:[%s3 + $0x10] sm:$0xff]
      %v341 = vld [vmem:[%s3 + $0x18] sm:$0xff]
      %v342 = vld [vmem:[%s4] sm:$0xff]
      %v343 = vld [vmem:[%s4 + $0x8] sm:$0xff]
      %v344 = vld [vmem:[%s4 + $0x10] sm:$0xff]
      %v345 = vld [vmem:[%s4 + $0x18] sm:$0xff]
      %347 = vset.pattern.permute.xlu0 0
      %348 = vperm.xlu0 %347, %v342
      %v349 = vpop.permute.xlu0 %348
      %352 = vset.pattern.permute.xlu0 0
      %353 = vperm.xlu0 %352, %v343
      %v354 = vpop.permute.xlu0 %353
      %357 = vset.pattern.permute.xlu0 0
      %358 = vperm.xlu0 %357, %v344
      %v359 = vpop.permute.xlu0 %358
      %362 = vset.pattern.permute.xlu0 0
      %363 = vperm.xlu0 %362, %v345
      %v364 = vpop.permute.xlu0 %363
      %vm366 = vcmask 261120
      %v368 = vsel %vm366, %v338, 0
      %v371 = vsel %vm366, %v339, 0
      %v374 = vsel %vm366, %v340, 0
      %v377 = vsel %vm366, %v341, 0
      %379 = vmatprep.subr.mxu0 0.0
      %380 = vmatpush1.msra.mxu0 0.0
      %381 = vmatprep.subr.mxu0 0.0
      %382 = vmatpush1.msra.mxu0 0.0
      %383 = vmatprep.subr.mxu0 0.0
      %384 = vmatpush1.msra.mxu0 0.0
      %385 = vmatprep.subr.mxu0 0.0
      %386 = vmatpush1.msra.mxu0 0.0
      %387 = vmatprep.subr.mxu0 0.0
      %388 = vmatpush1.msra.mxu0 0.0
      %389 = vmatprep.subr.mxu0 0.0
      %390 = vmatpush1.msra.mxu0 0.0
      %391 = vmatprep.subr.mxu0 0.0
      %392 = vmatpush1.msra.mxu0 0.0
      %393 = vmatprep.subr.mxu0 0.0
      %394 = vmatpush1.msra.mxu0 0.0
      %395 = vmatprep.subr.mxu0 0.0
      %396 = vmatpush1.msra.mxu0 0.0
      %397 = vmatprep.subr.mxu0 0.0
      %398 = vmatpush1.msra.mxu0 0.0
      %399 = vmatprep.subr.mxu0 0.0
      %400 = vmatpush1.msra.mxu0 0.0
      %401 = vmatprep.subr.mxu0 0.0
      %402 = vmatpush1.msra.mxu0 0.0
      %403 = vmatprep.subr.mxu0 0.0
      %404 = vmatpush1.msra.mxu0 %v337
      %405 = vmatprep.subr.mxu0 0.0
      %406 = vmatpush1.msra.mxu0 %v336
      %407 = vmatprep.subr.mxu0 0.0
      %408 = vmatpush1.msra.mxu0 %v335
      %409 = vmatprep.subr.mxu0 0.0
      %410 = vmatpush1.msra.mxu0 %v334
      %411 = vmatprep.subr.mxu0 0.0
      %412 = vmatpush2.msra.mxu0 0.0
      %413 = vmatprep.subr.mxu0 0.0
      %414 = vmatpush2.msra.mxu0 0.0
      %415 = vmatprep.subr.mxu0 0.0
      %416 = vmatpush2.msra.mxu0 0.0
      %417 = vmatprep.subr.mxu0 0.0
      %418 = vmatpush2.msra.mxu0 0.0
      %419 = vmatprep.subr.mxu0 0.0
      %420 = vmatpush2.msra.mxu0 0.0
      %421 = vmatprep.subr.mxu0 0.0
      %422 = vmatpush2.msra.mxu0 0.0
      %423 = vmatprep.subr.mxu0 0.0
      %424 = vmatpush2.msra.mxu0 0.0
      %425 = vmatprep.subr.mxu0 0.0
      %426 = vmatpush2.msra.mxu0 0.0
      %427 = vmatprep.subr.mxu0 0.0
      %428 = vmatpush2.msra.mxu0 0.0
      %429 = vmatprep.subr.mxu0 0.0
      %430 = vmatpush2.msra.mxu0 0.0
      %431 = vmatprep.subr.mxu0 0.0
      %432 = vmatpush2.msra.mxu0 0.0
      %433 = vmatprep.subr.mxu0 0.0
      %434 = vmatpush2.msra.mxu0 0.0
      %435 = vmatprep.subr.mxu0 0.0
      %436 = vmatpush2.msra.mxu0 0.0
      %437 = vmatprep.subr.mxu0 0.0
      %438 = vmatpush2.msra.mxu0 0.0
      %439 = vmatprep.subr.mxu0 0.0
      %440 = vmatpush2.msra.mxu0 0.0
      %441 = vmatprep.subr.mxu0 0.0
      %442 = vmatpush2.msra.mxu0 0.0
      %443 = vmatprep.mubr.f32.mxu0 0.0
      %444 = vmatmul.mubr.f32.gmra.mxu0 %v368
      %v445 = vpop.f32.mrf.mxu0
      %v446 = vadd.f32 %v349, %v445
      %v447 = vpop.f32.mrf.mxu0
      %448 = vmatprep.mubr.f32.mxu0 0.0
      %449 = vmatmul.mubr.f32.gmra.mxu0 %v371
      %v450 = vpop.f32.mrf.mxu0
      %v451 = vadd.f32 %v354, %v450
      %v452 = vpop.f32.mrf.mxu0
      %453 = vmatprep.mubr.f32.mxu0 0.0
      %454 = vmatmul.mubr.f32.gmra.mxu0 %v374
      %v455 = vpop.f32.mrf.mxu0
      %v456 = vadd.f32 %v359, %v455
      %v457 = vpop.f32.mrf.mxu0
      %458 = vmatprep.mubr.f32.mxu0 0.0
      %459 = vmatmul.mubr.f32.gmra.mxu0 %v377
      %v460 = vpop.f32.mrf.mxu0
      %v461 = vadd.f32 %v364, %v460
      %v462 = vpop.f32.mrf.mxu0
      %463 = vdwg.mxu0
      %v464 = vtanh.pop %v446
      %v465 = vtanh.pop %v451
      %v466 = vtanh.pop %v456
      %v467 = vtanh.pop %v461
      %v468 = vld [vmem:[%s5] sm:$0xff]
      %v469 = vld [vmem:[%s5 + $0x8] sm:$0xff]
      %v470 = vld [vmem:[%s5 + $0x10] sm:$0xff]
      %v471 = vld [vmem:[%s5 + $0x18] sm:$0xff]
      %473 = vset.pattern.permute.xlu0 0
      %474 = vperm.xlu0 %473, %v468
      %v475 = vpop.permute.xlu0 %474
      %478 = vset.pattern.permute.xlu0 0
      %479 = vperm.xlu0 %478, %v469
      %v480 = vpop.permute.xlu0 %479
      %483 = vset.pattern.permute.xlu0 0
      %484 = vperm.xlu0 %483, %v470
      %v485 = vpop.permute.xlu0 %484
      %488 = vset.pattern.permute.xlu0 0
      %489 = vperm.xlu0 %488, %v471
      %v490 = vpop.permute.xlu0 %489
      %v492 = vmul.f32 %v475, %v464
      %v493 = vmul.f32 %v480, %v465
      %v494 = vmul.f32 %v485, %v466
      %v495 = vmul.f32 %v490, %v467
      %v496 = vadd.f32 %v492, %v493
      %v497 = vadd.f32 %v496, %v494
      %v498 = vadd.f32 %v497, %v495
      %v499 = vrot.slane %v498, 4
      %v500 = vadd.f32 %v498, %v499
      %v501 = vrot.slane %v500, 2
      %v502 = vadd.f32 %v500, %v501
      %v503 = vrot.slane %v502, 1
      %v504 = vadd.f32 %v502, %v503
      %v505 = vld [vmem:[#allocation2] sm:$0x1]
      %507 = vset.pattern.permute.xlu0 0
      %508 = vperm.xlu0 %507, %v505
      %v509 = vpop.permute.xlu0 %508
      %v511 = vlaneseq
      %v512 = vshrl.u32 %v511, 7
      %v513 = vsub.s32 0, %v512
      %v514 = vrot.slane %v509, %v513
      %v515 = vadd.f32 %v504, %v514
      %516 = vst [vmem:[%s270] sm:$0x1] %v515
      %p517 = scmp.lt.s32.totalorder %s20, 2
      %s518 = scalar_select %p517, %s20, 2
      %s519 = scalar_lea.vmem %s7, %s518
      // Predicated region
      $region49: #{neural_net_forward.1} parent=47 // pred_check
        %p520 = pneg %p190
      $region50: #{neural_net_forward.1} parent=47 // pred_check_branch
        %522 = sbr.rel (%p520) target = $region52
      $region51: #{neural_net_forward.1} parent=47 // pred_region
        _
      $region52: #{neural_net_forward.1} parent=47 // pred_fallthru
        _
    $region48: #{neural_net_forward.1} parent=5 // pred_fallthru
      _
    %p523 = scmp.le.s32.totalorder 2, %s15
    // Predicated region
    $region53: #{neural_net_forward.1} parent=5 // pred_check
      %p524 = pneg %p523
    $region54: #{neural_net_forward.1} parent=5 // pred_check_branch
      %526 = sbr.rel (%p524) target = $region56
    $region55: #{neural_net_forward.1} parent=5 // pred_region
      %s527 = ssub.s32 %s15, 2
      // Predicated region
      $region57: #{neural_net_forward.1} parent=55 // pred_check
        %p528 = pneg %p196
      $region58: #{neural_net_forward.1} parent=55 // pred_check_branch
        %530 = sbr.rel (%p528) target = $region60
      $region59: #{neural_net_forward.1} parent=55 // pred_region
        %p531 = scmp.lt.s32.totalorder %s21, 2
        %s532 = scalar_select %p531, %s21, 2
        %s533 = scalar_lea.vmem %s7, %s532
      $region60: #{neural_net_forward.1} parent=55 // pred_fallthru
        _
    $region56: #{neural_net_forward.1} parent=5 // pred_fallthru
      _
  $region6: #{neural_net_forward.1} parent=0 // loop_footer
    %s19 = sadd.s32 1, %s15
  $region7: #{neural_net_forward.1} parent=0 // loop_footer_branch
    %14 = sbr.rel target = $region3
  $region8: #{neural_net_forward.1} parent=0 // loop_exit
    _

</llo_original>
